<compile_context>
chip_gen: v7x
topology: tpu7x:2x2x1
jax: 0.10.0
libtpu: 0.0.40
codegen_flags: <defaults>
</compile_context>

<pallas_src>
import functools

import jax
import jax.numpy as jnp
from jax.experimental import pallas as pl
from jax.experimental.pallas import tpu as pltpu

_LANES = 128


def _cdiv(a, b):
    return -(-a // b)


def _round_up(x, m):
    return ((x + m - 1) // m) * m


def _sublane_align(*dtypes):
    """Row multiple so every input meets its (sublane, 128) min-tile rule."""
    align = 8
    for dt in dtypes:
        itemsize = max(1, jnp.dtype(dt).itemsize)
        align = max(align, 8 * max(1, 4 // itemsize))   # f32:8, bf16:16, int8:32
    return align


def _choose_tiling(rows, align, max_row_tile, want_parts):
    """Pick (num_parts, steps, row_tile); prefer an exact (pad-free) fit."""
    max_rt = max(align, (max_row_tile // align) * align)
    parts_options = (want_parts, 1) if want_parts == 2 else (1,)
    for parts in parts_options:
        steps0 = _cdiv(rows, parts * max_rt)
        for steps in range(steps0, steps0 + 17):        # bounded exact-fit search
            if rows % (parts * steps):
                continue
            rt = rows // (parts * steps)
            if rt % align == 0 and rt <= max_rt:
                return parts, steps, rt
    # Fallback: right-sized tiling; padding bounded by alignment, not tile size.
    parts = want_parts
    steps = _cdiv(rows, parts * max_rt)
    rt = min(max_rt, _round_up(_cdiv(rows, parts * steps), align))
    return parts, steps, rt


def _focal_loss_kernel(x_ref, t_ref, o_ref, *, alpha, gamma, row_tile,
                       binary_targets):
    """One (row_tile, 128) tile: focal BCE elementwise + vreg-shaped partial sum."""
    s = pl.program_id(1)

    @pl.when(s == 0)
    def _():
        o_ref[...] = jnp.zeros_like(o_ref)

    x = x_ref[...].astype(jnp.float32)
    t = t_ref[...].astype(jnp.float32)

    # Numerically stable BCE-with-logits (reduction='none'):
    #   bce = max(x, 0) - x*t + log1p(exp(-|x|))
    e = jnp.exp(-jnp.abs(x))                               # EUP exp  (1)
    bce = jnp.maximum(x, 0.0) - x * t + jnp.log1p(e)       # EUP log1p(2)

    if binary_targets:
        # For t in {0, 1}:  exp(-bce) == [1 if (t==1)==(x>=0) else e] / (1 + e)
        # -> replaces a third full EUP exp with a reciprocal; the extra VPU
        # selects are hidden filler on BW-bound chips and this lifts the v7x
        # EUP ceiling.  Exact (approx=False) so it matches the generic path.
        numer = jnp.where((t >= 0.5) == (x >= 0.0), 1.0, e)
        pt = numer * pl.reciprocal(1.0 + e, approx=False)
    else:
        pt = jnp.exp(-bce)                                 # EUP exp  (3)

    om = 1.0 - pt
    # Specialize integer gammas: a float-exponent pow costs exp+log on the EUP.
    if gamma == 2.0:
        mod = om * om
    elif gamma == 1.0:
        mod = om
    elif gamma == 0.0:
        mod = jnp.ones_like(om)
    else:
        mod = om ** gamma
    focal = alpha * mod * bce

    # Vreg-shaped partial sum: (row_tile, 128) -> (row_tile//8, 8, 128) is a
    # layout-preserving sublane split; the axis-0 sum is pure VPU vreg adds.
    o_ref[...] += jnp.sum(focal.reshape(row_tile // 8, 8, _LANES), axis=0)


def _focal_at_zero(gamma, alpha, binary_targets):
    """focal(x=0, t=0) with the same f32 formula as the kernel (per padded elem)."""
    one = jnp.float32(1.0)
    e = jnp.exp(jnp.float32(0.0))      # 1.0
    bce = jnp.log1p(e)                 # log(2) in f32
    pt = one / (one + e) if binary_targets else jnp.exp(-bce)
    om = one - pt
    if gamma == 2.0:
        mod = om * om
    elif gamma == 1.0:
        mod = om
    elif gamma == 0.0:
        mod = one
    else:
        mod = om ** jnp.float32(gamma)
    return jnp.float32(alpha) * mod * bce


def focal_loss(inputs, targets, gamma=2.0, alpha=0.25, *,
               binary_targets=True, max_row_tile=4096):
    """Pallas TPU focal loss; matches FocalLoss(gamma, alpha)(inputs, targets).

    binary_targets=True assumes targets in {0, 1} (the usual focal-loss use) and
    enables an exact, EUP-cheaper rewrite of exp(-bce); pass False for soft /
    label-smoothed targets to use the generic path.
    """
    assert inputs.shape == targets.shape
    n_valid = int(inputs.size)
    assert n_valid > 0

    rows_needed = _cdiv(n_valid, _LANES)
    align = _sublane_align(inputs.dtype, targets.dtype)
    # 2-way leading "parallel" partition when there is enough work: lets the
    # compiler shard across both TensorCores on 2-TC chips; measured ~neutral on
    # single-core chips, and the right-sized tiling keeps extra padding bounded
    # by alignment rather than tile size.
    want_parts = 2 if rows_needed >= 2 * align else 1
    num_parts, steps, row_tile = _choose_tiling(rows_needed, align,
                                                max_row_tile, want_parts)
    total_rows = num_parts * steps * row_tile
    pad = total_rows * _LANES - n_valid

    x_flat = inputs.reshape(-1)
    t_flat = targets.reshape(-1)
    if pad:
        # Only awkward (non-factorable) sizes pay this copy; cleanly tiled sizes
        # take the zero-copy reshape path above.  The padded zeros are NOT
        # masked in the kernel: their exactly-known contribution is subtracted
        # below (constant-subtraction instead of per-element masking).
        x_flat = jnp.pad(x_flat, (0, pad))
        t_flat = jnp.pad(t_flat, (0, pad))
    x2 = x_flat.reshape(total_rows, _LANES)
    t2 = t_flat.reshape(total_rows, _LANES)

    kernel = functools.partial(
        _focal_loss_kernel, alpha=float(alpha), gamma=float(gamma),
        row_tile=row_tile, binary_targets=bool(binary_targets))

    in_spec = pl.BlockSpec((row_tile, _LANES), lambda p, s: (p * steps + s, 0))
    # Per-partition (8, 128) partial-sum slab: resident across the "arbitrary"
    # reduction axis (same block index for every s), lane-dense on writeback.
    out_spec = pl.BlockSpec((None, 8, _LANES), lambda p, s: (p, 0, 0))

    partials = pl.pallas_call(
        kernel,
        out_shape=jax.ShapeDtypeStruct((num_parts, 8, _LANES), jnp.float32),
        grid_spec=pltpu.PrefetchScalarGridSpec(
            num_scalar_prefetch=0,
            grid=(num_parts, steps),
            in_specs=[in_spec, in_spec],
            out_specs=out_spec,
        ),
        compiler_params=pltpu.CompilerParams(
            dimension_semantics=("parallel", "arbitrary"),
            # 2 inputs x 2 pipeline buffers x <=2 MiB plus elementwise
            # temporaries: well under this cap on v5e/v6e/v7x.
            vmem_limit_bytes=64 * 1024 * 1024),
    )(x2, t2)

    total = jnp.sum(partials)
    if pad:
        total = total - jnp.float32(pad) * _focal_at_zero(gamma, alpha,
                                                          binary_targets)
    # Single tiny cross-lane reduction + mean, done once in the wrapper.
    return total / n_valid


def focal_loss_ref(inputs, targets, gamma=2.0, alpha=0.25):
    x = inputs.astype(jnp.float32)
    t = targets.astype(jnp.float32)
    bce = jnp.maximum(x, 0.0) - x * t + jnp.log1p(jnp.exp(-jnp.abs(x)))
    pt = jnp.exp(-bce)
    return jnp.mean(alpha * (1.0 - pt) ** gamma * bce)


if __name__ == "__main__":
    key = jax.random.PRNGKey(0)
    k1, k2, k3, k4, k5 = jax.random.split(key, 5)

    # NCHW logits and binary targets, as the PyTorch forward implies.
    B, C, H, W = 2, 4, 16, 16
    logits = jax.random.normal(k1, (B, C, H, W), dtype=jnp.float32) * 2.0
    targets = (jax.random.uniform(k2, (B, C, H, W)) > 0.5).astype(jnp.float32)

    loss = jax.block_until_ready(focal_loss(logits, targets, gamma=2.0, alpha=0.25))
    ref = focal_loss_ref(logits, targets, gamma=2.0, alpha=0.25)
    assert jnp.allclose(loss, ref, rtol=1e-5, atol=1e-6), (loss, ref)

    # Odd-sized case: exercises the padded-tail + constant-subtraction path.
    shp = (3, 5, 7, 11)
    logits2 = jax.random.normal(k3, shp, dtype=jnp.float32) * 2.0
    targets2 = (jax.random.uniform(k4, shp) > 0.5).astype(jnp.float32)
    loss2 = jax.block_until_ready(focal_loss(logits2, targets2))
    ref2 = focal_loss_ref(logits2, targets2)
    assert jnp.allclose(loss2, ref2, rtol=1e-5, atol=1e-6), (loss2, ref2)

    # Soft targets: generic (non-binary) pt = exp(-bce) path.
    soft = jax.random.uniform(k5, (B, C, H, W), dtype=jnp.float32)
    loss3 = jax.block_until_ready(focal_loss(logits, soft, binary_targets=False))
    ref3 = focal_loss_ref(logits, soft)
    assert jnp.allclose(loss3, ref3, rtol=1e-5, atol=1e-6), (loss3, ref3)

    print("KERNEL_OK")
</pallas_src>

<mosaic_0001>
module attributes {stable_mosaic.version = 11 : i64} {
  func.func @_focal_loss_kernel(%arg0: i32, %arg1: i32, %arg2: memref<8x128xf32, #tpu.memory_space<vmem>>, %arg3: memref<8x128xf32, #tpu.memory_space<vmem>>, %arg4: memref<1x8x128xf32, #tpu.memory_space<vmem>>) attributes {dimension_semantics = [#tpu.dimension_semantics<parallel>, #tpu.dimension_semantics<arbitrary>], iteration_bounds = array<i64: 2, 1>, scalar_prefetch = 0 : i64, scratch_operands = 0 : i64, tpu.core_type = #tpu.core_type<tc>, window_params = [{transform_indices = @transform_0, window_bounds = array<i64: 8, 128>}, {transform_indices = @transform_1, window_bounds = array<i64: 8, 128>}, {transform_indices = @transform_2, window_bounds = array<i64: 1, 8, 128>}]} {
    %c0_i32 = arith.constant 0 : i32
    %0 = arith.cmpi eq, %arg1, %c0_i32 : i32
    %1 = arith.extui %0 : i1 to i32
    %c0_i32_0 = arith.constant 0 : i32
    %2 = arith.cmpi ne, %1, %c0_i32_0 : i32
    scf.if %2 {
      %cst_19 = arith.constant 0.000000e+00 : f32
      %41 = vector.broadcast %cst_19 : f32 to vector<8x128xf32>
      %c0_20 = arith.constant 0 : index
      %c0_21 = arith.constant 0 : index
      %c0_22 = arith.constant 0 : index
      %42 = vector.load %arg4[%c0_20, %c0_21, %c0_22] : memref<1x8x128xf32, #tpu.memory_space<vmem>>, vector<1x8x128xf32>
      %43 = vector.shape_cast %42 : vector<1x8x128xf32> to vector<8x128xf32>
      %44 = vector.shape_cast %41 : vector<8x128xf32> to vector<1x8x128xf32>
      tpu.vector_store %arg4[%c0_20, %c0_21, %c0_22], %44 {strides = array<i32>} : memref<1x8x128xf32, #tpu.memory_space<vmem>>, vector<1x8x128xf32>,
    } else {
    }
    %c0 = arith.constant 0 : index
    %c0_1 = arith.constant 0 : index
    %3 = vector.load %arg2[%c0, %c0_1] : memref<8x128xf32, #tpu.memory_space<vmem>>, vector<8x128xf32>
    %c0_2 = arith.constant 0 : index
    %c0_3 = arith.constant 0 : index
    %4 = vector.load %arg3[%c0_2, %c0_3] : memref<8x128xf32, #tpu.memory_space<vmem>>, vector<8x128xf32>
    %5 = math.absf %3 : vector<8x128xf32>
    %cst = arith.constant 0.000000e+00 : f32
    %6 = vector.broadcast %cst : f32 to vector<8x128xf32>
    %7 = arith.subf %6, %5 : vector<8x128xf32>
    %8 = math.exp %7 : vector<8x128xf32>
    %cst_4 = arith.constant 0.000000e+00 : f32
    %9 = vector.broadcast %cst_4 : f32 to vector<8x128xf32>
    %10 = arith.maximumf %3, %9 : vector<8x128xf32>
    %11 = arith.mulf %3, %4 : vector<8x128xf32>
    %12 = arith.subf %10, %11 : vector<8x128xf32>
    %13 = math.log1p %8 : vector<8x128xf32>
    %14 = arith.addf %12, %13 : vector<8x128xf32>
    %cst_5 = arith.constant 5.000000e-01 : f32
    %15 = vector.broadcast %cst_5 : f32 to vector<8x128xf32>
    %16 = arith.cmpf oge, %4, %15 : vector<8x128xf32>
    %cst_6 = arith.constant 0.000000e+00 : f32
    %17 = vector.broadcast %cst_6 : f32 to vector<8x128xf32>
    %18 = arith.cmpf oge, %3, %17 : vector<8x128xf32>
    %19 = arith.xori %16, %18 : vector<8x128xi1>
    %cst_7 = arith.constant dense<true> : vector<8x128xi1>
    %20 = arith.xori %19, %cst_7 : vector<8x128xi1>
    %cst_8 = arith.constant 1.000000e+00 : f32
    %21 = vector.broadcast %cst_8 : f32 to vector<8x128xf32>
    %22 = arith.select %20, %21, %8 : vector<8x128xi1>, vector<8x128xf32>
    %cst_9 = arith.constant 1.000000e+00 : f32
    %23 = vector.broadcast %cst_9 : f32 to vector<8x128xf32>
    %24 = arith.addf %23, %8 : vector<8x128xf32>
    %25 = tpu.reciprocal %24 : vector<8x128xf32> -> vector<8x128xf32>
    %26 = arith.mulf %22, %25 : vector<8x128xf32>
    %cst_10 = arith.constant 1.000000e+00 : f32
    %27 = vector.broadcast %cst_10 : f32 to vector<8x128xf32>
    %28 = arith.subf %27, %26 : vector<8x128xf32>
    %29 = arith.mulf %28, %28 : vector<8x128xf32>
    %cst_11 = arith.constant 2.500000e-01 : f32
    %30 = vector.broadcast %cst_11 : f32 to vector<8x128xf32>
    %31 = arith.mulf %30, %29 : vector<8x128xf32>
    %32 = arith.mulf %31, %14 : vector<8x128xf32>
    %c0_12 = arith.constant 0 : index
    %c0_13 = arith.constant 0 : index
    %c0_14 = arith.constant 0 : index
    %33 = vector.load %arg4[%c0_12, %c0_13, %c0_14] : memref<1x8x128xf32, #tpu.memory_space<vmem>>, vector<1x8x128xf32>
    %34 = vector.shape_cast %33 : vector<1x8x128xf32> to vector<8x128xf32>
    %35 = vector.shape_cast %32 : vector<8x128xf32> to vector<1x8x128xf32>
    %cst_15 = arith.constant dense<0.000000e+00> : vector<8x128xf32>
    %36 = vector.multi_reduction <add>, %35, %cst_15 [0] : vector<1x8x128xf32> to vector<8x128xf32>
    %37 = arith.addf %34, %36 : vector<8x128xf32>
    %c0_16 = arith.constant 0 : index
    %c0_17 = arith.constant 0 : index
    %c0_18 = arith.constant 0 : index
    %38 = vector.load %arg4[%c0_16, %c0_17, %c0_18] : memref<1x8x128xf32, #tpu.memory_space<vmem>>, vector<1x8x128xf32>
    %39 = vector.shape_cast %38 : vector<1x8x128xf32> to vector<8x128xf32>
    %40 = vector.shape_cast %37 : vector<8x128xf32> to vector<1x8x128xf32>
    tpu.vector_store %arg4[%c0_16, %c0_17, %c0_18], %40 {strides = array<i32>} : memref<1x8x128xf32, #tpu.memory_space<vmem>>, vector<1x8x128xf32>,
    return
  }
  func.func @transform_0(%arg0: i32, %arg1: i32) -> (i32, i32) {
    %c1_i32 = arith.constant 1 : i32
    %0 = arith.muli %arg0, %c1_i32 : i32
    %1 = arith.addi %0, %arg1 : i32
    %c0_i32 = arith.constant 0 : i32
    %c0_i32_0 = arith.constant 0 : i32
    return %1, %c0_i32 : i32, i32
  }
  func.func @transform_1(%arg0: i32, %arg1: i32) -> (i32, i32) {
    %c1_i32 = arith.constant 1 : i32
    %0 = arith.muli %arg0, %c1_i32 : i32
    %1 = arith.addi %0, %arg1 : i32
    %c0_i32 = arith.constant 0 : i32
    %c0_i32_0 = arith.constant 0 : i32
    return %1, %c0_i32 : i32, i32
  }
  func.func @transform_2(%arg0: i32, %arg1: i32) -> (i32, i32, i32) {
    %c0_i32 = arith.constant 0 : i32
    %c0_i32_0 = arith.constant 0 : i32
    %c0_i32_1 = arith.constant 0 : i32
    return %arg0, %c0_i32, %c0_i32_0 : i32, i32, i32
  }
}

</mosaic_0001>

<llo_original>
// kernel: tpu_custom_call.1
$region0: #{tpu_custom_call.1}
  #allocation0 [shape = 'u32[]', space=smem, size = 0x4, offset = 0x4, fixed_abs, tag = 'smem constant byte address 0x4 - core index']
  #allocation1 [shape = 'u32[144,128]{1,0:T(1,128)}', space=vmem, size = 0x12000, scoped, tag = 'internal scratch']
  %s0 = inlined_call_operand.hbm [shape: f32[16,128], index: 0, kind: input, shape index: {}]
  %s1 = inlined_call_operand.hbm [shape: f32[16,128], index: 1, kind: input, shape index: {}]
  %s2 = inlined_call_operand.hbm [shape: f32[2,8,128], index: 2, kind: output, shape index: {}]
  %s3 = sld [smem:[#allocation0]]
  $region53: #{tpu_custom_call.1} parent=0
    _
  %s5 = ssub.s32 1, %s3
  %s6 = scalar_select 0, %s5, %s3
  $region1: #{tpu_custom_call.1} parent=0
    #allocation2 [shape = 'u8[8192]{0}', space=vmem, size = 0x2000, scoped, tag = 'input window, operand 0']
    #allocation3 [shape = 's32[2]{0}', space=sflag, size = 0x8, scoped, tag = 'scoped memory for tpu_custom_call.1']
    #allocation4 [shape = 's32[2]{0}', space=sflag, size = 0x8, scoped, tag = 'scoped memory for tpu_custom_call.1']
    #allocation5 [shape = 'u8[8192]{0}', space=vmem, size = 0x2000, scoped, tag = 'input window, operand 1']
    #allocation6 [shape = 's32[2]{0}', space=sflag, size = 0x8, scoped, tag = 'scoped memory for tpu_custom_call.1']
    #allocation7 [shape = 'u8[8192]{0}', space=vmem, size = 0x2000, scoped, tag = 'output window, operand 0']
    %7 = vsyncpa [#allocation3], 0
    %s8 = scalar_lea.sflag [#allocation3], 1
    %9 = vsyncpa %s8, 0
    %10 = vsyncpa [#allocation6], 0
    %s11 = scalar_lea.sflag [#allocation6], 1
    %12 = vsyncpa %s11, 0
    %13 = vsyncpa [#allocation4], 0
    %s14 = scalar_lea.sflag [#allocation4], 1
    %15 = vsyncpa %s14, 0
    loop: start=0, step=1, limit=4
    $region2: #{tpu_custom_call.1} parent=1 // loop_pre_header
      _
    $region3: #{tpu_custom_call.1} parent=1 // loop_header
      %s17 = sphi 0, %s21
      %p18 = scmp.ge.s32.totalorder %s17, 4
      %s24 = sphi 0, %s36
      %s25 = sphi 0, %s32
      %s26 = sphi 0, %s24
      %s27 = sphi 0, %s25
      %s28 = sphi 0, %s26
      %s29 = sphi 0, %s27
      %s41 = sphi 0, %s43
      %s44 = sphi 0, %s41
      %s45 = sphi 0, %s44
      %s61 = sphi 0, %s45
      %s69 = sphi 0, %s71
      %s72 = sphi 0, %s69
      %s73 = sphi 0, %s72
      %s89 = sphi 0, %s73
      %s95 = sphi 0, %s97
      %s98 = sphi 0, %s95
      %s99 = sphi 0, %s98
      %s115 = sphi 0, %s99
    $region4: #{tpu_custom_call.1} parent=1 // loop_header_branch
      %20 = sbr.rel (%p18) target = $region8
    $region5: #{tpu_custom_call.1} parent=1 // loop_body
      %s22 = ssub.s32 %s17, 1
      %s23 = ssub.s32 %s17, 2
      %s30 = sadd.s32 1, %s25
      %p31 = scmp.ge.s32.totalorder %s30, 1
      %s32 = scalar_select %p31, 0, %s30
      %s33 = sadd.s32 1, %s24
      %s34 = scalar_select %p31, %s33, %s24
      %p35 = scmp.ge.s32.totalorder %s34, 2
      %s36 = scalar_select %p35, 0, %s34
      %s37 = sadd.s32 %s24, %s25
      %s38 = sadd.s32 %s36, %s32
      %s39 = ssub.s32 %s37, %s38
      %p40 = scmp.eq.s32.totalorder %s39, 0
      %s42 = sadd.s32 %s41, 1
      %s43 = scalar_select %p40, %s41, %s42
      %p46 = pneg %p40
      %p47 = scmp.eq.s32.totalorder %s17, 1
      %p48 = por %p46, %p47
      %p49 = scmp.ne.s32.totalorder %s41, %s44
      %p50 = scmp.eq.s32.totalorder %s17, 0
      %p51 = por %p49, %p50
      %p52 = scmp.ne.s32.totalorder %s41, %s44
      %p53 = scmp.eq.s32.totalorder %s22, 1
      %p54 = por %p52, %p53
      %p55 = scmp.ne.s32.totalorder %s44, %s45
      %p56 = scmp.eq.s32.totalorder %s22, 0
      %p57 = por %p55, %p56
      %p58 = scmp.ne.s32.totalorder %s44, %s45
      %p59 = scmp.eq.s32.totalorder %s23, 1
      %p60 = por %p58, %p59
      %p62 = scmp.ne.s32.totalorder %s45, %s61
      %p63 = scmp.eq.s32.totalorder %s23, 0
      %p64 = por %p62, %p63
      %s65 = sadd.s32 %s24, %s25
      %s66 = sadd.s32 %s36, %s32
      %s67 = ssub.s32 %s65, %s66
      %p68 = scmp.eq.s32.totalorder %s67, 0
      %s70 = sadd.s32 %s69, 1
      %s71 = scalar_select %p68, %s69, %s70
      %p74 = pneg %p68
      %p75 = scmp.eq.s32.totalorder %s17, 1
      %p76 = por %p74, %p75
      %p77 = scmp.ne.s32.totalorder %s69, %s72
      %p78 = scmp.eq.s32.totalorder %s17, 0
      %p79 = por %p77, %p78
      %p80 = scmp.ne.s32.totalorder %s69, %s72
      %p81 = scmp.eq.s32.totalorder %s22, 1
      %p82 = por %p80, %p81
      %p83 = scmp.ne.s32.totalorder %s72, %s73
      %p84 = scmp.eq.s32.totalorder %s22, 0
      %p85 = por %p83, %p84
      %p86 = scmp.ne.s32.totalorder %s72, %s73
      %p87 = scmp.eq.s32.totalorder %s23, 1
      %p88 = por %p86, %p87
      %p90 = scmp.ne.s32.totalorder %s73, %s89
      %p91 = scmp.eq.s32.totalorder %s23, 0
      %p92 = por %p90, %p91
      %s93 = ssub.s32 %s24, %s36
      %p94 = scmp.eq.s32.totalorder %s93, 0
      %s96 = sadd.s32 %s95, 1
      %s97 = scalar_select %p94, %s95, %s96
      %p100 = pneg %p94
      %p101 = scmp.eq.s32.totalorder %s17, 1
      %p102 = por %p100, %p101
      %p103 = scmp.ne.s32.totalorder %s95, %s98
      %p104 = scmp.eq.s32.totalorder %s17, 0
      %p105 = por %p103, %p104
      %p106 = scmp.ne.s32.totalorder %s95, %s98
      %p107 = scmp.eq.s32.totalorder %s22, 1
      %p108 = por %p106, %p107
      %p109 = scmp.ne.s32.totalorder %s98, %s99
      %p110 = scmp.eq.s32.totalorder %s22, 0
      %p111 = por %p109, %p110
      %p112 = scmp.ne.s32.totalorder %s98, %s99
      %p113 = scmp.eq.s32.totalorder %s23, 1
      %p114 = por %p112, %p113
      %p116 = scmp.ne.s32.totalorder %s99, %s115
      %p117 = scmp.eq.s32.totalorder %s23, 0
      %p118 = por %p116, %p117
      %p119 = scmp.le.s32.totalorder 1, %s17
      %p120 = scmp.lt.s32.totalorder %s17, 3
      %p121 = pnand %p119, %p120
      %p122 = pneg %p121
      // Predicated region
      $region9: #{tpu_custom_call.1} parent=5 // pred_check
        _
      $region10: #{tpu_custom_call.1} parent=5 // pred_check_branch
        %124 = sbr.rel (%p121) target = $region12
      $region11: #{tpu_custom_call.1} parent=5 // pred_region
        %s125 = ssub.s32 %s17, 1
      $region12: #{tpu_custom_call.1} parent=5 // pred_fallthru
        _
      %p126 = scmp.lt.s32.totalorder %s17, 2
      // Predicated region
      $region13: #{tpu_custom_call.1} parent=5 // pred_check
        %p127 = pneg %p126
      $region14: #{tpu_custom_call.1} parent=5 // pred_check_branch
        %129 = sbr.rel (%p127) target = $region16
      $region15: #{tpu_custom_call.1} parent=5 // pred_region
        // Predicated region
        $region17: #{tpu_custom_call.1} parent=15 // pred_check
          %p130 = pneg %p51
        $region18: #{tpu_custom_call.1} parent=15 // pred_check_branch
          %132 = sbr.rel (%p130) target = $region20
        $region19: #{tpu_custom_call.1} parent=15 // pred_region
          %s133 = sand.u32 %s41, 1
          %s134 = scalar_lea.sflag [#allocation3], %s133
          %s135 = sand.u32 %s41, 1
          %s136 = smul.addr %s135, 8
          %s137 = scalar_lea.vmem [#allocation2], %s136
          %s138 = sadd.s32 %s24, %s25
          %s140 = ssub.s32 128, 128
          %141 = vsyncadd %s134, %s140
          %s142 = smul.addr %s138, 128
          %s143 = scalar_lea.hbm %s0, %s142
          %s145 = sshll.u32 %s137, 4
          %s146 = int_to_ptr.vmem [resolvable:$true] %s145
          %148 = dma.hbm_to_vmem [thread:$0]  %s143, 128, %s146, %s134
        $region20: #{tpu_custom_call.1} parent=15 // pred_fallthru
          _
        // Predicated region
        $region21: #{tpu_custom_call.1} parent=15 // pred_check
          %p149 = pneg %p79
        $region22: #{tpu_custom_call.1} parent=15 // pred_check_branch
          %151 = sbr.rel (%p149) target = $region24
        $region23: #{tpu_custom_call.1} parent=15 // pred_region
          %s152 = sand.u32 %s69, 1
          %s153 = scalar_lea.sflag [#allocation6], %s152
          %s154 = sand.u32 %s69, 1
          %s155 = smul.addr %s154, 8
          %s156 = scalar_lea.vmem [#allocation5], %s155
          %s157 = sadd.s32 %s24, %s25
          %s159 = ssub.s32 128, 128
          %160 = vsyncadd %s153, %s159
          %s161 = smul.addr %s157, 128
          %s162 = scalar_lea.hbm %s1, %s161
          %s164 = sshll.u32 %s156, 4
          %s165 = int_to_ptr.vmem [resolvable:$true] %s164
          %167 = dma.hbm_to_vmem [thread:$0]  %s162, 128, %s165, %s153
        $region24: #{tpu_custom_call.1} parent=15 // pred_fallthru
          _
      $region16: #{tpu_custom_call.1} parent=5 // pred_fallthru
        _
      %p168 = scmp.le.s32.totalorder 1, %s17
      %p169 = scmp.lt.s32.totalorder %s17, 3
      %p170 = pnand %p168, %p169
      %p171 = pneg %p170
      // Predicated region
      $region25: #{tpu_custom_call.1} parent=5 // pred_check
        _
      $region26: #{tpu_custom_call.1} parent=5 // pred_check_branch
        %173 = sbr.rel (%p170) target = $region28
      $region27: #{tpu_custom_call.1} parent=5 // pred_region
        %s174 = ssub.s32 %s17, 1
        %s175 = sand.u32 %s44, 1
        %s176 = scalar_lea.sflag [#allocation3], %s175
        %s177 = sand.u32 %s44, 1
        %s178 = smul.addr %s177, 8
        %s179 = scalar_lea.vmem [#allocation2], %s178
        // Predicated region
        $region29: #{tpu_custom_call.1} parent=27 // pred_check
          %p180 = pneg %p57
        $region30: #{tpu_custom_call.1} parent=27 // pred_check_branch
          %182 = sbr.rel (%p180) target = $region32
        $region31: #{tpu_custom_call.1} parent=27 // pred_region
          %183 = dma.done %s176, 128
        $region32: #{tpu_custom_call.1} parent=27 // pred_fallthru
          _
        %s184 = sand.u32 %s72, 1
        %s185 = scalar_lea.sflag [#allocation6], %s184
        %s186 = sand.u32 %s72, 1
        %s187 = smul.addr %s186, 8
        %s188 = scalar_lea.vmem [#allocation5], %s187
        // Predicated region
        $region33: #{tpu_custom_call.1} parent=27 // pred_check
          %p189 = pneg %p85
        $region34: #{tpu_custom_call.1} parent=27 // pred_check_branch
          %191 = sbr.rel (%p189) target = $region36
        $region35: #{tpu_custom_call.1} parent=27 // pred_region
          %192 = dma.done %s185, 128
        $region36: #{tpu_custom_call.1} parent=27 // pred_fallthru
          _
        %s193 = sand.u32 %s44, 1
        %s194 = scalar_lea.sflag [#allocation3], %s193
        %s195 = sand.u32 %s44, 1
        %s196 = smul.addr %s195, 8
        %s197 = scalar_lea.vmem [#allocation2], %s196
        %p198 = pneg %p57
        %p199 = pneg %p54
        %s200 = sand.u32 %s72, 1
        %s201 = scalar_lea.sflag [#allocation6], %s200
        %s202 = sand.u32 %s72, 1
        %s203 = smul.addr %s202, 8
        %s204 = scalar_lea.vmem [#allocation5], %s203
        %p205 = pneg %p85
        %p206 = pneg %p82
        %p207 = pneg %p111
        %p208 = pneg %p108
        %s209 = sand.u32 %s98, 1
        %s210 = scalar_lea.sflag [#allocation4], %s209
        %s211 = sand.u32 %s98, 1
        %s212 = smul.addr %s211, 8
        %s213 = scalar_lea.vmem [#allocation7], %s212
        %s214 = sadd.s32 %s26, %s27
        %s215 = sadd.s32 %s26, %s27
        %p216 = scmp.eq.s32.totalorder %s27, 0
        // Predicated region
        $region37: #{tpu_custom_call.1} parent=27 // pred_check
          %p217 = pneg %p216
        $region38: #{tpu_custom_call.1} parent=27 // pred_check_branch
          %219 = sbr.rel (%p217) target = $region40
        $region39: #{tpu_custom_call.1} parent=27 // pred_region
          %220 = vst [vmem:[%s213] sm:$0xff] 0.0
        $region40: #{tpu_custom_call.1} parent=27 // pred_fallthru
          _
        %v221 = vld [vmem:[%s179] sm:$0xff]
        %v222 = vld [vmem:[%s188] sm:$0xff]
        %v223 = vand.u32 2147483647, %v221
        %v224 = vsub.f32 0.0, %v223
        %v225 = vmul.f32 %v224, 1.442695
        %v226 = vpow.pop %v225
        %v227 = vmax.f32 %v221, 0.0
        %v228 = vmul.f32 %v221, %v222
        %v229 = vsub.f32 %v227, %v228
        %v230 = vadd.f32 %v226, 1.0
        %v231 = vlog2.pop %v230
        %v232 = vmul.f32 %v231, 0.6931472
        %v233 = vmul.f32 -0.5, %v226
        %v234 = vadd.f32 %v233, 1.0
        %v235 = vmul.f32 %v234, %v226
        %v236 = vand.u32 2147483647, %v226
        %vm237 = vcmp.lt.f32.partialorder %v236, 0.0004427343
        %v238 = vsel %vm237, %v235, %v232
        %v239 = vadd.f32 %v229, %v238
        %vm240 = vcmp.ge.f32.partialorder %v222, 0.5
        %vm241 = vcmp.ge.f32.partialorder %v221, 0.0
        %vm242 = vmxor %vm240, %vm241
        %vm243 = vmxor %vm242, 1
        %v244 = vsel %vm243, 1.0, %v226
        %v245 = vadd.f32 %v226, 1.0
        %v246 = vrcp.pop %v245
        %v247 = vmul.f32 %v244, %v246
        %v248 = vsub.f32 1.0, %v247
        %v249 = vmul.f32 %v248, %v248
        %v250 = vmul.f32 %v249, 0.25
        %v251 = vmul.f32 %v250, %v239
        %v252 = vld [vmem:[%s213] sm:$0xff]
        %v253 = vadd.f32 %v251, 0.0
        %v254 = vadd.f32 %v252, %v253
        %255 = vst [vmem:[%s213] sm:$0xff] %v254
        %s256 = sand.u32 %s98, 1
        %s257 = scalar_lea.sflag [#allocation4], %s256
        %s258 = sand.u32 %s98, 1
        %s259 = smul.addr %s258, 8
        %s260 = scalar_lea.vmem [#allocation7], %s259
        // Predicated region
        $region41: #{tpu_custom_call.1} parent=27 // pred_check
          %p261 = pneg %p108
        $region42: #{tpu_custom_call.1} parent=27 // pred_check_branch
          %263 = sbr.rel (%p261) target = $region44
        $region43: #{tpu_custom_call.1} parent=27 // pred_region
          %s265 = ssub.s32 128, 128
          %266 = vsyncadd %s257, %s265
          %s267 = smul.addr %s26, 128
          %s268 = scalar_lea.hbm %s2, %s267
          %s270 = sshll.u32 %s260, 4
          %s271 = int_to_ptr.vmem [resolvable:$true] %s270
          %273 = dma.vmem_to_hbm [thread:$0]  %s271, 128, %s268, %s257
        $region44: #{tpu_custom_call.1} parent=27 // pred_fallthru
          _
      $region28: #{tpu_custom_call.1} parent=5 // pred_fallthru
        _
      %p274 = scmp.le.s32.totalorder 2, %s17
      // Predicated region
      $region45: #{tpu_custom_call.1} parent=5 // pred_check
        %p275 = pneg %p274
      $region46: #{tpu_custom_call.1} parent=5 // pred_check_branch
        %277 = sbr.rel (%p275) target = $region48
      $region47: #{tpu_custom_call.1} parent=5 // pred_region
        %s278 = ssub.s32 %s17, 2
        // Predicated region
        $region49: #{tpu_custom_call.1} parent=47 // pred_check
          %p279 = pneg %p114
        $region50: #{tpu_custom_call.1} parent=47 // pred_check_branch
          %281 = sbr.rel (%p279) target = $region52
        $region51: #{tpu_custom_call.1} parent=47 // pred_region
          %s282 = sand.u32 %s99, 1
          %s283 = scalar_lea.sflag [#allocation4], %s282
          %s284 = sand.u32 %s99, 1
          %s285 = smul.addr %s284, 8
          %s286 = scalar_lea.vmem [#allocation7], %s285
          %287 = dma.done %s283, 128
        $region52: #{tpu_custom_call.1} parent=47 // pred_fallthru
          _
      $region48: #{tpu_custom_call.1} parent=5 // pred_fallthru
        _
    $region6: #{tpu_custom_call.1} parent=1 // loop_footer
      %s21 = sadd.s32 1, %s17
    $region7: #{tpu_custom_call.1} parent=1 // loop_footer_branch
      %16 = sbr.rel target = $region3
    $region8: #{tpu_custom_call.1} parent=1 // loop_exit
      _
    %288 = vsyncpa [#allocation3], 1
    %s289 = scalar_lea.sflag [#allocation3], 1
    %290 = vsyncpa %s289, 1
    %291 = vsyncpa [#allocation6], 1
    %s292 = scalar_lea.sflag [#allocation6], 1
    %293 = vsyncpa %s292, 1
    %294 = vsyncpa [#allocation4], 1
    %s295 = scalar_lea.sflag [#allocation4], 1
    %296 = vsyncpa %s295, 1

</llo_original>
